<compile_context>
chip_gen: v7x
topology: tpu7x:2x2x1
jax: 0.10.0
libtpu: 0.0.40
codegen_flags: <defaults>
</compile_context>

<pallas_src>
import jax
import jax.numpy as jnp
import numpy as np
from jax.experimental import pallas as pl


def lstm_kernel(x_ref, w_ref, out_ref):
    # x_ref:  (B, T)          input sequence (input_size == 1, squeezed)
    # w_ref:  (rows, 4H)      packed parameters, rows padded to a multiple of 8:
    #           rows [0, H)   : W_hh  (hidden -> gates, pre-transposed (H, 4H))
    #           row  H        : W_ih  (input -> gates, input_size == 1)
    #           row  H + 1    : b_ih + b_hh
    #           row  H + 2    : W_fc^T, first H lanes valid (rest zero)
    #           row  H + 3    : b_fc at lane 0
    # out_ref: (B, 1)
    B, T = x_ref.shape
    H4 = w_ref.shape[1]
    H = H4 // 4

    whh = w_ref[0:H, :].astype(jnp.bfloat16)      # bf16 MXU operand (hoisted)
    wih = w_ref[H:H + 1, :]                       # (1, 4H)
    b = w_ref[H + 1:H + 2, :]                     # (1, 4H)
    wfc = w_ref[H + 2:H + 3, 0:H]                 # (1, H)
    bfc = w_ref[H + 3:H + 4, 0:1]                 # (1, 1)

    x = x_ref[...]                                # (B, T)

    # Hoisted input projection: input_size == 1 -> pure VPU broadcast-multiply
    # per timestep, computed up front and off the serial recurrence chain.
    xw = [x[:, t:t + 1] * wih + b for t in range(T)]          # T x (B, 4H)

    # Single-EUP-pass nonlinearity constants (hoisted):
    #   sigmoid(v) = 0.5 * tanh(0.5 * v) + 0.5  on i/f/o lanes,
    #   tanh(v)    = 1.0 * tanh(1.0 * v) + 0.0  on g lanes [2H, 3H).
    lane = jax.lax.broadcasted_iota(jnp.int32, (B, H4), 1)
    g_lanes = (lane >= 2 * H) & (lane < 3 * H)
    pre = jnp.where(g_lanes, 1.0, 0.5).astype(jnp.float32)    # also post-scale
    off = jnp.where(g_lanes, 0.0, 0.5).astype(jnp.float32)

    h = jnp.zeros((B, H), jnp.float32)
    c = jnp.zeros((B, H), jnp.float32)

    # T is small and static -> fully unroll the strictly serial recurrence.
    for t in range(T):
        gates = xw[t] + jnp.dot(h.astype(jnp.bfloat16), whh,
                                preferred_element_type=jnp.float32)   # (B, 4H)
        act = jnp.tanh(gates * pre) * pre + off       # one EUP pass, all gates
        i_g = act[:, 0:H]
        f_g = act[:, H:2 * H]
        g_g = act[:, 2 * H:3 * H]
        o_g = act[:, 3 * H:4 * H]
        c = f_g * c + i_g * g_g
        h = o_g * jnp.tanh(c)

    # fc head on the VPU/XLU: multiply + cross-lane sum; no MXU tail.
    out = jnp.sum(h * wfc, axis=-1, keepdims=True) + bfc
    out_ref[...] = out.astype(out_ref.dtype)


def pack_params(wih, whh, b, wfc, bfc):
    """Pack all parameters into one (8,128)-aligned f32 block (see kernel)."""
    # TODO(synk): packing assumes input_size == 1 (the module default); a
    # general input_size would need an (I, 4H) W_ih block and a per-step
    # input matmul.
    H = whh.shape[0]
    H4 = 4 * H
    rows = ((H + 4 + 7) // 8) * 8
    w = jnp.zeros((rows, H4), jnp.float32)
    w = w.at[0:H, :].set(whh)
    w = w.at[H, :].set(wih[0])
    w = w.at[H + 1, :].set(b[0])
    w = w.at[H + 2, 0:H].set(wfc[:, 0])
    w = w.at[H + 3, 0].set(bfc[0, 0])
    return w


def lstm_model_forward(x, packed_w):
    """x: (B, T, 1) batch-first (PyTorch convention). Returns (B, 1)."""
    B, T, I = x.shape
    assert I == 1, "kernel is specialized to input_size == 1"
    x2 = x.reshape(B, T)   # free squeeze; no host-side transpose needed

    return pl.pallas_call(
        lstm_kernel,
        out_shape=jax.ShapeDtypeStruct((B, 1), jnp.float32),
        grid=(1,),
        in_specs=[
            pl.BlockSpec((B, T), lambda i: (0, 0)),
            pl.BlockSpec(packed_w.shape, lambda i: (0, 0)),
        ],
        out_specs=pl.BlockSpec((B, 1), lambda i: (0, 0)),
    )(x2, packed_w)


def lstm_model_ref(x, params):
    """Pure-JAX reference matching PyTorch nn.LSTM (1 layer) + Linear."""
    B, T, I = x.shape
    H = params["whh"].shape[0]
    h = jnp.zeros((B, H), jnp.float32)
    c = jnp.zeros((B, H), jnp.float32)
    for t in range(T):
        gates = x[:, t, :] @ params["wih"] + h @ params["whh"] + params["b"]
        i_g = jax.nn.sigmoid(gates[:, 0:H])
        f_g = jax.nn.sigmoid(gates[:, H:2 * H])
        g_g = jnp.tanh(gates[:, 2 * H:3 * H])
        o_g = jax.nn.sigmoid(gates[:, 3 * H:4 * H])
        c = f_g * c + i_g * g_g
        h = o_g * jnp.tanh(c)
    return h @ params["wfc"] + params["bfc"]


def init_params(key, input_size=1, hidden_size=32):
    """Deterministic init mimicking PyTorch uniform(-1/sqrt(H), 1/sqrt(H))."""
    H, I = hidden_size, input_size
    k = 1.0 / np.sqrt(H)
    ks = jax.random.split(key, 6)
    wih = jax.random.uniform(ks[0], (I, 4 * H), jnp.float32, -k, k)
    whh = jax.random.uniform(ks[1], (H, 4 * H), jnp.float32, -k, k)
    b_ih = jax.random.uniform(ks[2], (1, 4 * H), jnp.float32, -k, k)
    b_hh = jax.random.uniform(ks[3], (1, 4 * H), jnp.float32, -k, k)
    wfc = jax.random.uniform(ks[4], (H, 1), jnp.float32, -k, k)
    bfc = jax.random.uniform(ks[5], (1, 1), jnp.float32, -k, k)
    return {"wih": wih, "whh": whh, "b": b_ih + b_hh, "wfc": wfc, "bfc": bfc}


if __name__ == "__main__":
    key = jax.random.PRNGKey(0)
    pkey, xkey = jax.random.split(key)

    B, T, I, H = 8, 8, 1, 32
    params = init_params(pkey, input_size=I, hidden_size=H)
    packed_w = pack_params(params["wih"], params["whh"], params["b"],
                           params["wfc"], params["bfc"])
    x = jax.random.normal(xkey, (B, T, I), jnp.float32)

    out = lstm_model_forward(x, packed_w)
    out = jax.block_until_ready(out)

    ref = lstm_model_ref(x, params)
    # Tolerance relaxed (1e-5 -> 1e-2) because the recurrent matmul now runs
    # with bf16 MXU operands (f32 accumulation); observed error is ~1e-3.
    np.testing.assert_allclose(np.asarray(out), np.asarray(ref),
                               rtol=1e-2, atol=1e-2)
    print("KERNEL_OK")
</pallas_src>

<mosaic_0001>
module attributes {stable_mosaic.version = 11 : i64} {
  func.func @lstm_kernel(%arg0: i32, %arg1: memref<8x8xf32, #tpu.memory_space<vmem>>, %arg2: memref<40x128xf32, #tpu.memory_space<vmem>>, %arg3: memref<8x1xf32, #tpu.memory_space<vmem>>) attributes {dimension_semantics = [#tpu.dimension_semantics<arbitrary>], iteration_bounds = array<i64: 1>, scalar_prefetch = 0 : i64, scratch_operands = 0 : i64, tpu.core_type = #tpu.core_type<tc>, window_params = [{pipeline_mode = #tpu.pipeline_mode<synchronous>, transform_indices = @transform_0, window_bounds = array<i64: 8, 8>}, {pipeline_mode = #tpu.pipeline_mode<synchronous>, transform_indices = @transform_1, window_bounds = array<i64: 40, 128>}, {pipeline_mode = #tpu.pipeline_mode<synchronous>, transform_indices = @transform_2, window_bounds = array<i64: 8, 1>}]} {
    %c0 = arith.constant 0 : index
    %c0_0 = arith.constant 0 : index
    %0 = vector.load %arg2[%c0, %c0_0] : memref<40x128xf32, #tpu.memory_space<vmem>>, vector<32x128xf32>
    %1 = arith.truncf %0 : vector<32x128xf32> to vector<32x128xbf16>
    %c32 = arith.constant 32 : index
    %c0_1 = arith.constant 0 : index
    %2 = vector.load %arg2[%c32, %c0_1] : memref<40x128xf32, #tpu.memory_space<vmem>>, vector<1x128xf32>
    %c33 = arith.constant 33 : index
    %c0_2 = arith.constant 0 : index
    %3 = vector.load %arg2[%c33, %c0_2] : memref<40x128xf32, #tpu.memory_space<vmem>>, vector<1x128xf32>
    %c34 = arith.constant 34 : index
    %c0_3 = arith.constant 0 : index
    %4 = vector.load %arg2[%c34, %c0_3] : memref<40x128xf32, #tpu.memory_space<vmem>>, vector<1x32xf32>
    %c35 = arith.constant 35 : index
    %c0_4 = arith.constant 0 : index
    %5 = vector.load %arg2[%c35, %c0_4] : memref<40x128xf32, #tpu.memory_space<vmem>>, vector<1x1xf32>
    %c0_5 = arith.constant 0 : index
    %c0_6 = arith.constant 0 : index
    %6 = vector.load %arg1[%c0_5, %c0_6] : memref<8x8xf32, #tpu.memory_space<vmem>>, vector<8x8xf32>
    %7 = vector.extract_strided_slice %6 {offsets = [0, 0], sizes = [8, 1], strides = [1, 1]} : vector<8x8xf32> to vector<8x1xf32>
    %8 = vector.broadcast %7 : vector<8x1xf32> to vector<8x128xf32>
    %9 = vector.broadcast %2 : vector<1x128xf32> to vector<8x128xf32>
    %10 = arith.mulf %8, %9 : vector<8x128xf32>
    %11 = vector.broadcast %3 : vector<1x128xf32> to vector<8x128xf32>
    %12 = arith.addf %10, %11 : vector<8x128xf32>
    %13 = vector.extract_strided_slice %6 {offsets = [0, 1], sizes = [8, 1], strides = [1, 1]} : vector<8x8xf32> to vector<8x1xf32>
    %14 = vector.broadcast %13 : vector<8x1xf32> to vector<8x128xf32>
    %15 = vector.broadcast %2 : vector<1x128xf32> to vector<8x128xf32>
    %16 = arith.mulf %14, %15 : vector<8x128xf32>
    %17 = vector.broadcast %3 : vector<1x128xf32> to vector<8x128xf32>
    %18 = arith.addf %16, %17 : vector<8x128xf32>
    %19 = vector.extract_strided_slice %6 {offsets = [0, 2], sizes = [8, 1], strides = [1, 1]} : vector<8x8xf32> to vector<8x1xf32>
    %20 = vector.broadcast %19 : vector<8x1xf32> to vector<8x128xf32>
    %21 = vector.broadcast %2 : vector<1x128xf32> to vector<8x128xf32>
    %22 = arith.mulf %20, %21 : vector<8x128xf32>
    %23 = vector.broadcast %3 : vector<1x128xf32> to vector<8x128xf32>
    %24 = arith.addf %22, %23 : vector<8x128xf32>
    %25 = vector.extract_strided_slice %6 {offsets = [0, 3], sizes = [8, 1], strides = [1, 1]} : vector<8x8xf32> to vector<8x1xf32>
    %26 = vector.broadcast %25 : vector<8x1xf32> to vector<8x128xf32>
    %27 = vector.broadcast %2 : vector<1x128xf32> to vector<8x128xf32>
    %28 = arith.mulf %26, %27 : vector<8x128xf32>
    %29 = vector.broadcast %3 : vector<1x128xf32> to vector<8x128xf32>
    %30 = arith.addf %28, %29 : vector<8x128xf32>
    %31 = vector.extract_strided_slice %6 {offsets = [0, 4], sizes = [8, 1], strides = [1, 1]} : vector<8x8xf32> to vector<8x1xf32>
    %32 = vector.broadcast %31 : vector<8x1xf32> to vector<8x128xf32>
    %33 = vector.broadcast %2 : vector<1x128xf32> to vector<8x128xf32>
    %34 = arith.mulf %32, %33 : vector<8x128xf32>
    %35 = vector.broadcast %3 : vector<1x128xf32> to vector<8x128xf32>
    %36 = arith.addf %34, %35 : vector<8x128xf32>
    %37 = vector.extract_strided_slice %6 {offsets = [0, 5], sizes = [8, 1], strides = [1, 1]} : vector<8x8xf32> to vector<8x1xf32>
    %38 = vector.broadcast %37 : vector<8x1xf32> to vector<8x128xf32>
    %39 = vector.broadcast %2 : vector<1x128xf32> to vector<8x128xf32>
    %40 = arith.mulf %38, %39 : vector<8x128xf32>
    %41 = vector.broadcast %3 : vector<1x128xf32> to vector<8x128xf32>
    %42 = arith.addf %40, %41 : vector<8x128xf32>
    %43 = vector.extract_strided_slice %6 {offsets = [0, 6], sizes = [8, 1], strides = [1, 1]} : vector<8x8xf32> to vector<8x1xf32>
    %44 = vector.broadcast %43 : vector<8x1xf32> to vector<8x128xf32>
    %45 = vector.broadcast %2 : vector<1x128xf32> to vector<8x128xf32>
    %46 = arith.mulf %44, %45 : vector<8x128xf32>
    %47 = vector.broadcast %3 : vector<1x128xf32> to vector<8x128xf32>
    %48 = arith.addf %46, %47 : vector<8x128xf32>
    %49 = vector.extract_strided_slice %6 {offsets = [0, 7], sizes = [8, 1], strides = [1, 1]} : vector<8x8xf32> to vector<8x1xf32>
    %50 = vector.broadcast %49 : vector<8x1xf32> to vector<8x128xf32>
    %51 = vector.broadcast %2 : vector<1x128xf32> to vector<8x128xf32>
    %52 = arith.mulf %50, %51 : vector<8x128xf32>
    %53 = vector.broadcast %3 : vector<1x128xf32> to vector<8x128xf32>
    %54 = arith.addf %52, %53 : vector<8x128xf32>
    %55 = tpu.iota {dimensions = array<i32: 1>} : vector<8x128xi32>
    %c64_i32 = arith.constant 64 : i32
    %56 = vector.broadcast %c64_i32 : i32 to vector<8x128xi32>
    %57 = arith.cmpi sge, %55, %56 : vector<8x128xi32>
    %c96_i32 = arith.constant 96 : i32
    %58 = vector.broadcast %c96_i32 : i32 to vector<8x128xi32>
    %59 = arith.cmpi slt, %55, %58 : vector<8x128xi32>
    %60 = arith.andi %57, %59 : vector<8x128xi1>
    %cst = arith.constant 1.000000e+00 : f32
    %cst_7 = arith.constant 5.000000e-01 : f32
    %61 = vector.broadcast %cst : f32 to vector<8x128xf32>
    %62 = vector.broadcast %cst_7 : f32 to vector<8x128xf32>
    %63 = arith.select %60, %61, %62 : vector<8x128xi1>, vector<8x128xf32>
    %cst_8 = arith.constant 0.000000e+00 : f32
    %cst_9 = arith.constant 5.000000e-01 : f32
    %64 = vector.broadcast %cst_8 : f32 to vector<8x128xf32>
    %65 = vector.broadcast %cst_9 : f32 to vector<8x128xf32>
    %66 = arith.select %60, %64, %65 : vector<8x128xi1>, vector<8x128xf32>
    %cst_10 = arith.constant 0.000000e+00 : f32
    %67 = vector.broadcast %cst_10 : f32 to vector<8x32xf32>
    %cst_11 = arith.constant 0.000000e+00 : f32
    %68 = vector.broadcast %cst_11 : f32 to vector<8x32xf32>
    %69 = arith.truncf %67 : vector<8x32xf32> to vector<8x32xbf16>
    %cst_12 = arith.constant dense<0.000000e+00> : vector<8x128xf32>
    %70 = tpu.matmul %69, %1, %cst_12 {dimension_numbers = #tpu.dot_dimension_numbers<[1], [0], [0], [1], [0, 0, 1, 1], [], []>} : vector<8x32xbf16>, vector<32x128xbf16>, vector<8x128xf32> -> vector<8x128xf32>
    %71 = arith.addf %12, %70 : vector<8x128xf32>
    %72 = arith.mulf %71, %63 : vector<8x128xf32>
    %73 = math.tanh %72 : vector<8x128xf32>
    %74 = arith.mulf %73, %63 : vector<8x128xf32>
    %75 = arith.addf %74, %66 : vector<8x128xf32>
    %76 = vector.extract_strided_slice %75 {offsets = [0, 0], sizes = [8, 32], strides = [1, 1]} : vector<8x128xf32> to vector<8x32xf32>
    %77 = vector.extract_strided_slice %75 {offsets = [0, 32], sizes = [8, 32], strides = [1, 1]} : vector<8x128xf32> to vector<8x32xf32>
    %78 = vector.extract_strided_slice %75 {offsets = [0, 64], sizes = [8, 32], strides = [1, 1]} : vector<8x128xf32> to vector<8x32xf32>
    %79 = vector.extract_strided_slice %75 {offsets = [0, 96], sizes = [8, 32], strides = [1, 1]} : vector<8x128xf32> to vector<8x32xf32>
    %80 = arith.mulf %77, %68 : vector<8x32xf32>
    %81 = arith.mulf %76, %78 : vector<8x32xf32>
    %82 = arith.addf %80, %81 : vector<8x32xf32>
    %83 = math.tanh %82 : vector<8x32xf32>
    %84 = arith.mulf %79, %83 : vector<8x32xf32>
    %85 = arith.truncf %84 : vector<8x32xf32> to vector<8x32xbf16>
    %cst_13 = arith.constant dense<0.000000e+00> : vector<8x128xf32>
    %86 = tpu.matmul %85, %1, %cst_13 {dimension_numbers = #tpu.dot_dimension_numbers<[1], [0], [0], [1], [0, 0, 1, 1], [], []>} : vector<8x32xbf16>, vector<32x128xbf16>, vector<8x128xf32> -> vector<8x128xf32>
    %87 = arith.addf %18, %86 : vector<8x128xf32>
    %88 = arith.mulf %87, %63 : vector<8x128xf32>
    %89 = math.tanh %88 : vector<8x128xf32>
    %90 = arith.mulf %89, %63 : vector<8x128xf32>
    %91 = arith.addf %90, %66 : vector<8x128xf32>
    %92 = vector.extract_strided_slice %91 {offsets = [0, 0], sizes = [8, 32], strides = [1, 1]} : vector<8x128xf32> to vector<8x32xf32>
    %93 = vector.extract_strided_slice %91 {offsets = [0, 32], sizes = [8, 32], strides = [1, 1]} : vector<8x128xf32> to vector<8x32xf32>
    %94 = vector.extract_strided_slice %91 {offsets = [0, 64], sizes = [8, 32], strides = [1, 1]} : vector<8x128xf32> to vector<8x32xf32>
    %95 = vector.extract_strided_slice %91 {offsets = [0, 96], sizes = [8, 32], strides = [1, 1]} : vector<8x128xf32> to vector<8x32xf32>
    %96 = arith.mulf %93, %82 : vector<8x32xf32>
    %97 = arith.mulf %92, %94 : vector<8x32xf32>
    %98 = arith.addf %96, %97 : vector<8x32xf32>
    %99 = math.tanh %98 : vector<8x32xf32>
    %100 = arith.mulf %95, %99 : vector<8x32xf32>
    %101 = arith.truncf %100 : vector<8x32xf32> to vector<8x32xbf16>
    %cst_14 = arith.constant dense<0.000000e+00> : vector<8x128xf32>
    %102 = tpu.matmul %101, %1, %cst_14 {dimension_numbers = #tpu.dot_dimension_numbers<[1], [0], [0], [1], [0, 0, 1, 1], [], []>} : vector<8x32xbf16>, vector<32x128xbf16>, vector<8x128xf32> -> vector<8x128xf32>
    %103 = arith.addf %24, %102 : vector<8x128xf32>
    %104 = arith.mulf %103, %63 : vector<8x128xf32>
    %105 = math.tanh %104 : vector<8x128xf32>
    %106 = arith.mulf %105, %63 : vector<8x128xf32>
    %107 = arith.addf %106, %66 : vector<8x128xf32>
    %108 = vector.extract_strided_slice %107 {offsets = [0, 0], sizes = [8, 32], strides = [1, 1]} : vector<8x128xf32> to vector<8x32xf32>
    %109 = vector.extract_strided_slice %107 {offsets = [0, 32], sizes = [8, 32], strides = [1, 1]} : vector<8x128xf32> to vector<8x32xf32>
    %110 = vector.extract_strided_slice %107 {offsets = [0, 64], sizes = [8, 32], strides = [1, 1]} : vector<8x128xf32> to vector<8x32xf32>
    %111 = vector.extract_strided_slice %107 {offsets = [0, 96], sizes = [8, 32], strides = [1, 1]} : vector<8x128xf32> to vector<8x32xf32>
    %112 = arith.mulf %109, %98 : vector<8x32xf32>
    %113 = arith.mulf %108, %110 : vector<8x32xf32>
    %114 = arith.addf %112, %113 : vector<8x32xf32>
    %115 = math.tanh %114 : vector<8x32xf32>
    %116 = arith.mulf %111, %115 : vector<8x32xf32>
    %117 = arith.truncf %116 : vector<8x32xf32> to vector<8x32xbf16>
    %cst_15 = arith.constant dense<0.000000e+00> : vector<8x128xf32>
    %118 = tpu.matmul %117, %1, %cst_15 {dimension_numbers = #tpu.dot_dimension_numbers<[1], [0], [0], [1], [0, 0, 1, 1], [], []>} : vector<8x32xbf16>, vector<32x128xbf16>, vector<8x128xf32> -> vector<8x128xf32>
    %119 = arith.addf %30, %118 : vector<8x128xf32>
    %120 = arith.mulf %119, %63 : vector<8x128xf32>
    %121 = math.tanh %120 : vector<8x128xf32>
    %122 = arith.mulf %121, %63 : vector<8x128xf32>
    %123 = arith.addf %122, %66 : vector<8x128xf32>
    %124 = vector.extract_strided_slice %123 {offsets = [0, 0], sizes = [8, 32], strides = [1, 1]} : vector<8x128xf32> to vector<8x32xf32>
    %125 = vector.extract_strided_slice %123 {offsets = [0, 32], sizes = [8, 32], strides = [1, 1]} : vector<8x128xf32> to vector<8x32xf32>
    %126 = vector.extract_strided_slice %123 {offsets = [0, 64], sizes = [8, 32], strides = [1, 1]} : vector<8x128xf32> to vector<8x32xf32>
    %127 = vector.extract_strided_slice %123 {offsets = [0, 96], sizes = [8, 32], strides = [1, 1]} : vector<8x128xf32> to vector<8x32xf32>
    %128 = arith.mulf %125, %114 : vector<8x32xf32>
    %129 = arith.mulf %124, %126 : vector<8x32xf32>
    %130 = arith.addf %128, %129 : vector<8x32xf32>
    %131 = math.tanh %130 : vector<8x32xf32>
    %132 = arith.mulf %127, %131 : vector<8x32xf32>
    %133 = arith.truncf %132 : vector<8x32xf32> to vector<8x32xbf16>
    %cst_16 = arith.constant dense<0.000000e+00> : vector<8x128xf32>
    %134 = tpu.matmul %133, %1, %cst_16 {dimension_numbers = #tpu.dot_dimension_numbers<[1], [0], [0], [1], [0, 0, 1, 1], [], []>} : vector<8x32xbf16>, vector<32x128xbf16>, vector<8x128xf32> -> vector<8x128xf32>
    %135 = arith.addf %36, %134 : vector<8x128xf32>
    %136 = arith.mulf %135, %63 : vector<8x128xf32>
    %137 = math.tanh %136 : vector<8x128xf32>
    %138 = arith.mulf %137, %63 : vector<8x128xf32>
    %139 = arith.addf %138, %66 : vector<8x128xf32>
    %140 = vector.extract_strided_slice %139 {offsets = [0, 0], sizes = [8, 32], strides = [1, 1]} : vector<8x128xf32> to vector<8x32xf32>
    %141 = vector.extract_strided_slice %139 {offsets = [0, 32], sizes = [8, 32], strides = [1, 1]} : vector<8x128xf32> to vector<8x32xf32>
    %142 = vector.extract_strided_slice %139 {offsets = [0, 64], sizes = [8, 32], strides = [1, 1]} : vector<8x128xf32> to vector<8x32xf32>
    %143 = vector.extract_strided_slice %139 {offsets = [0, 96], sizes = [8, 32], strides = [1, 1]} : vector<8x128xf32> to vector<8x32xf32>
    %144 = arith.mulf %141, %130 : vector<8x32xf32>
    %145 = arith.mulf %140, %142 : vector<8x32xf32>
    %146 = arith.addf %144, %145 : vector<8x32xf32>
    %147 = math.tanh %146 : vector<8x32xf32>
    %148 = arith.mulf %143, %147 : vector<8x32xf32>
    %149 = arith.truncf %148 : vector<8x32xf32> to vector<8x32xbf16>
    %cst_17 = arith.constant dense<0.000000e+00> : vector<8x128xf32>
    %150 = tpu.matmul %149, %1, %cst_17 {dimension_numbers = #tpu.dot_dimension_numbers<[1], [0], [0], [1], [0, 0, 1, 1], [], []>} : vector<8x32xbf16>, vector<32x128xbf16>, vector<8x128xf32> -> vector<8x128xf32>
    %151 = arith.addf %42, %150 : vector<8x128xf32>
    %152 = arith.mulf %151, %63 : vector<8x128xf32>
    %153 = math.tanh %152 : vector<8x128xf32>
    %154 = arith.mulf %153, %63 : vector<8x128xf32>
    %155 = arith.addf %154, %66 : vector<8x128xf32>
    %156 = vector.extract_strided_slice %155 {offsets = [0, 0], sizes = [8, 32], strides = [1, 1]} : vector<8x128xf32> to vector<8x32xf32>
    %157 = vector.extract_strided_slice %155 {offsets = [0, 32], sizes = [8, 32], strides = [1, 1]} : vector<8x128xf32> to vector<8x32xf32>
    %158 = vector.extract_strided_slice %155 {offsets = [0, 64], sizes = [8, 32], strides = [1, 1]} : vector<8x128xf32> to vector<8x32xf32>
    %159 = vector.extract_strided_slice %155 {offsets = [0, 96], sizes = [8, 32], strides = [1, 1]} : vector<8x128xf32> to vector<8x32xf32>
    %160 = arith.mulf %157, %146 : vector<8x32xf32>
    %161 = arith.mulf %156, %158 : vector<8x32xf32>
    %162 = arith.addf %160, %161 : vector<8x32xf32>
    %163 = math.tanh %162 : vector<8x32xf32>
    %164 = arith.mulf %159, %163 : vector<8x32xf32>
    %165 = arith.truncf %164 : vector<8x32xf32> to vector<8x32xbf16>
    %cst_18 = arith.constant dense<0.000000e+00> : vector<8x128xf32>
    %166 = tpu.matmul %165, %1, %cst_18 {dimension_numbers = #tpu.dot_dimension_numbers<[1], [0], [0], [1], [0, 0, 1, 1], [], []>} : vector<8x32xbf16>, vector<32x128xbf16>, vector<8x128xf32> -> vector<8x128xf32>
    %167 = arith.addf %48, %166 : vector<8x128xf32>
    %168 = arith.mulf %167, %63 : vector<8x128xf32>
    %169 = math.tanh %168 : vector<8x128xf32>
    %170 = arith.mulf %169, %63 : vector<8x128xf32>
    %171 = arith.addf %170, %66 : vector<8x128xf32>
    %172 = vector.extract_strided_slice %171 {offsets = [0, 0], sizes = [8, 32], strides = [1, 1]} : vector<8x128xf32> to vector<8x32xf32>
    %173 = vector.extract_strided_slice %171 {offsets = [0, 32], sizes = [8, 32], strides = [1, 1]} : vector<8x128xf32> to vector<8x32xf32>
    %174 = vector.extract_strided_slice %171 {offsets = [0, 64], sizes = [8, 32], strides = [1, 1]} : vector<8x128xf32> to vector<8x32xf32>
    %175 = vector.extract_strided_slice %171 {offsets = [0, 96], sizes = [8, 32], strides = [1, 1]} : vector<8x128xf32> to vector<8x32xf32>
    %176 = arith.mulf %173, %162 : vector<8x32xf32>
    %177 = arith.mulf %172, %174 : vector<8x32xf32>
    %178 = arith.addf %176, %177 : vector<8x32xf32>
    %179 = math.tanh %178 : vector<8x32xf32>
    %180 = arith.mulf %175, %179 : vector<8x32xf32>
    %181 = arith.truncf %180 : vector<8x32xf32> to vector<8x32xbf16>
    %cst_19 = arith.constant dense<0.000000e+00> : vector<8x128xf32>
    %182 = tpu.matmul %181, %1, %cst_19 {dimension_numbers = #tpu.dot_dimension_numbers<[1], [0], [0], [1], [0, 0, 1, 1], [], []>} : vector<8x32xbf16>, vector<32x128xbf16>, vector<8x128xf32> -> vector<8x128xf32>
    %183 = arith.addf %54, %182 : vector<8x128xf32>
    %184 = arith.mulf %183, %63 : vector<8x128xf32>
    %185 = math.tanh %184 : vector<8x128xf32>
    %186 = arith.mulf %185, %63 : vector<8x128xf32>
    %187 = arith.addf %186, %66 : vector<8x128xf32>
    %188 = vector.extract_strided_slice %187 {offsets = [0, 0], sizes = [8, 32], strides = [1, 1]} : vector<8x128xf32> to vector<8x32xf32>
    %189 = vector.extract_strided_slice %187 {offsets = [0, 32], sizes = [8, 32], strides = [1, 1]} : vector<8x128xf32> to vector<8x32xf32>
    %190 = vector.extract_strided_slice %187 {offsets = [0, 64], sizes = [8, 32], strides = [1, 1]} : vector<8x128xf32> to vector<8x32xf32>
    %191 = vector.extract_strided_slice %187 {offsets = [0, 96], sizes = [8, 32], strides = [1, 1]} : vector<8x128xf32> to vector<8x32xf32>
    %192 = arith.mulf %189, %178 : vector<8x32xf32>
    %193 = arith.mulf %188, %190 : vector<8x32xf32>
    %194 = arith.addf %192, %193 : vector<8x32xf32>
    %195 = math.tanh %194 : vector<8x32xf32>
    %196 = arith.mulf %191, %195 : vector<8x32xf32>
    %197 = vector.broadcast %4 : vector<1x32xf32> to vector<8x32xf32>
    %198 = arith.mulf %196, %197 : vector<8x32xf32>
    %cst_20 = arith.constant dense<0.000000e+00> : vector<8xf32>
    %199 = vector.multi_reduction <add>, %198, %cst_20 [1] : vector<8x32xf32> to vector<8xf32>
    %200 = vector.shape_cast %199 : vector<8xf32> to vector<8x1xf32>
    %201 = vector.broadcast %5 : vector<1x1xf32> to vector<8x1xf32>
    %202 = arith.addf %200, %201 : vector<8x1xf32>
    %c0_21 = arith.constant 0 : index
    %c0_22 = arith.constant 0 : index
    %203 = vector.load %arg3[%c0_21, %c0_22] : memref<8x1xf32, #tpu.memory_space<vmem>>, vector<8x1xf32>
    tpu.vector_store %arg3[%c0_21, %c0_22], %202 {strides = array<i32>} : memref<8x1xf32, #tpu.memory_space<vmem>>, vector<8x1xf32>,
    return
  }
  func.func @transform_0(%arg0: i32) -> (i32, i32) {
    %c0_i32 = arith.constant 0 : i32
    %c0_i32_0 = arith.constant 0 : i32
    %c0_i32_1 = arith.constant 0 : i32
    return %c0_i32, %c0_i32_0 : i32, i32
  }
  func.func @transform_1(%arg0: i32) -> (i32, i32) {
    %c0_i32 = arith.constant 0 : i32
    %c0_i32_0 = arith.constant 0 : i32
    %c0_i32_1 = arith.constant 0 : i32
    return %c0_i32, %c0_i32_0 : i32, i32
  }
  func.func @transform_2(%arg0: i32) -> (i32, i32) {
    %c0_i32 = arith.constant 0 : i32
    %c0_i32_0 = arith.constant 0 : i32
    %c0_i32_1 = arith.constant 0 : i32
    return %c0_i32, %c0_i32_0 : i32, i32
  }
}

</mosaic_0001>

<llo_original>
// kernel: tpu_custom_call.1
$region0: #{tpu_custom_call.1}
  #allocation0 [shape = 'u32[]', space=smem, size = 0x4, offset = 0x4, fixed_abs, tag = 'smem constant byte address 0x4 - core index']
  #allocation1 [shape = 'u32[144,128]{1,0:T(1,128)}', space=vmem, size = 0x12000, scoped, tag = 'internal scratch']
  %s0 = inlined_call_operand.hbm [shape: f32[8,8], index: 0, kind: input, shape index: {}]
  %s1 = inlined_call_operand.hbm [shape: f32[40,128], index: 1, kind: input, shape index: {}]
  %s2 = inlined_call_operand.vmem [shape: f32[8,1], index: 2, kind: output, shape index: {}]
  %s3 = sld [smem:[#allocation0]]
  $region26: #{tpu_custom_call.1} parent=0
    _
  %s5 = ssub.s32 1, %s3
  %s6 = scalar_select 0, %s5, %s3
  $region1: #{tpu_custom_call.1} parent=0
    #allocation2 [shape = 'u8[4096]{0}', space=vmem, size = 0x1000, scoped, tag = 'input window, operand 0, single buffered']
    #allocation3 [shape = 's32[1]{0}', space=sflag, size = 0x4, scoped, tag = 'scoped memory for tpu_custom_call.1']
    #allocation4 [shape = 'u8[20480]{0}', space=vmem, size = 0x5000, scoped, tag = 'input window, operand 1, single buffered']
    #allocation5 [shape = 's32[1]{0}', space=sflag, size = 0x4, scoped, tag = 'scoped memory for tpu_custom_call.1']
    %7 = vsyncpa [#allocation3], 0
    %8 = vsyncpa [#allocation5], 0
    // Predicated region
    $region2: #{tpu_custom_call.1} parent=1 // pred_check
      _
    $region3: #{tpu_custom_call.1} parent=1 // pred_check_branch
      %10 = sbr.rel (0) target = $region5
    $region4: #{tpu_custom_call.1} parent=1 // pred_region
      %s12 = ssub.s32 128, 128
      %13 = vsyncadd [#allocation3], %s12
      %s15 = sshll.u32 [#allocation2], 4
      %s16 = int_to_ptr.vmem [resolvable:$true] %s15
      %18 = dma.hbm_to_vmem [thread:$0]  %s0, 128, %s16, [#allocation3]
    $region5: #{tpu_custom_call.1} parent=1 // pred_fallthru
      _
    // Predicated region
    $region6: #{tpu_custom_call.1} parent=1 // pred_check
      _
    $region7: #{tpu_custom_call.1} parent=1 // pred_check_branch
      %20 = sbr.rel (0) target = $region9
    $region8: #{tpu_custom_call.1} parent=1 // pred_region
      %s22 = ssub.s32 640, 640
      %23 = vsyncadd [#allocation5], %s22
      %s24 = sshll.u32 [#allocation4], 4
      %s25 = int_to_ptr.vmem [resolvable:$true] %s24
      %30 = dma.hbm_to_vmem [thread:$0]  %s1, 640, %s25, [#allocation5], 128, 128, 8
    $region9: #{tpu_custom_call.1} parent=1 // pred_fallthru
      _
    // Predicated region
    $region10: #{tpu_custom_call.1} parent=1 // pred_check
      _
    $region11: #{tpu_custom_call.1} parent=1 // pred_check_branch
      %32 = sbr.rel (0) target = $region13
    $region12: #{tpu_custom_call.1} parent=1 // pred_region
      %33 = dma.done [#allocation3], 128
    $region13: #{tpu_custom_call.1} parent=1 // pred_fallthru
      _
    // Predicated region
    $region14: #{tpu_custom_call.1} parent=1 // pred_check
      _
    $region15: #{tpu_custom_call.1} parent=1 // pred_check_branch
      %35 = sbr.rel (0) target = $region17
    $region16: #{tpu_custom_call.1} parent=1 // pred_region
      %36 = dma.done [#allocation5], 640
    $region17: #{tpu_custom_call.1} parent=1 // pred_fallthru
      _
    %v38 = vld [vmem:[#allocation4] sm:$0xff]
    %v39 = vld [vmem:[#allocation4 + $0x8] sm:$0xff]
    %v40 = vld [vmem:[#allocation4 + $0x10] sm:$0xff]
    %v41 = vld [vmem:[#allocation4 + $0x18] sm:$0xff]
    %v42 = vpack.c.bf16 %v39, %v38
    %v43 = vpack.c.bf16 %v41, %v40
    %v44 = vld [vmem:[#allocation4 + $0x20] sm:$0x1]
    %v45 = vld [vmem:[#allocation4 + $0x21] sm:$0x1]
    %v46 = vld [vmem:[#allocation4 + $0x22] sm:$0x1]
    %v47 = vld [vmem:[#allocation4 + $0x23] sm:$0x1]
    %v48 = vld [vmem:[#allocation2] sm:$0xff]
    %50 = vset.pattern.permute.xlu0 0
    %51 = vperm.xlu0 %50, %v48
    %v52 = vpop.permute.xlu0 %51
    %v54 = vlaneseq
    %v55 = vshrl.u32 %v54, 7
    %v56 = vsub.s32 0, %v55
    %v57 = vrot.slane %v44, %v56
    %v58 = vmul.f32 %v52, %v57
    %v59 = vlaneseq
    %v60 = vshrl.u32 %v59, 7
    %v61 = vsub.s32 0, %v60
    %v62 = vrot.slane %v45, %v61
    %v63 = vadd.f32 %v58, %v62
    %64 = vset.pattern.permute.xlu0 1
    %65 = vperm.xlu0 %64, %v48
    %v66 = vpop.permute.xlu0 %65
    %v68 = vmul.f32 %v66, %v57
    %v69 = vadd.f32 %v68, %v62
    %70 = vset.pattern.permute.xlu0 2
    %71 = vperm.xlu0 %70, %v48
    %v72 = vpop.permute.xlu0 %71
    %v74 = vmul.f32 %v72, %v57
    %v75 = vadd.f32 %v74, %v62
    %76 = vset.pattern.permute.xlu0 3
    %77 = vperm.xlu0 %76, %v48
    %v78 = vpop.permute.xlu0 %77
    %v80 = vmul.f32 %v78, %v57
    %v81 = vadd.f32 %v80, %v62
    %82 = vset.pattern.permute.xlu0 4
    %83 = vperm.xlu0 %82, %v48
    %v84 = vpop.permute.xlu0 %83
    %v86 = vmul.f32 %v84, %v57
    %v87 = vadd.f32 %v86, %v62
    %88 = vset.pattern.permute.xlu0 5
    %89 = vperm.xlu0 %88, %v48
    %v90 = vpop.permute.xlu0 %89
    %v92 = vmul.f32 %v90, %v57
    %v93 = vadd.f32 %v92, %v62
    %94 = vset.pattern.permute.xlu0 6
    %95 = vperm.xlu0 %94, %v48
    %v96 = vpop.permute.xlu0 %95
    %v98 = vmul.f32 %v96, %v57
    %v99 = vadd.f32 %v98, %v62
    %100 = vset.pattern.permute.xlu0 7
    %101 = vperm.xlu0 %100, %v48
    %v102 = vpop.permute.xlu0 %101
    %v104 = vmul.f32 %v102, %v57
    %v105 = vadd.f32 %v104, %v62
    %v106 = vlaneseq
    %v107 = vand.u32 %v106, 127
    %vm108 = vcmp.ge.s32.totalorder %v107, 64
    %vm109 = vcmp.lt.s32.totalorder %v107, 96
    %vm110 = vmand %vm108, %vm109
    %v111 = vsel %vm110, 1.0, 0.5
    %v112 = vsel %vm110, 0.0, 0.5
    %vm113 = vcmask 261120
    %v115 = vsel %vm113, 0, 0
    %117 = vmatprep.subr.bf16.mxu0 0
    %118 = vmatpush1.bf16.msra.mxu0 %v42
    %119 = vmatprep.subr.bf16.mxu0 0
    %120 = vmatpush1.bf16.msra.mxu0 %v43
    %121 = vmatprep.subr.bf16.mxu0 0
    %122 = vmatpush1.bf16.msra.mxu0 0
    %123 = vmatprep.subr.bf16.mxu0 0
    %124 = vmatpush1.bf16.msra.mxu0 0
    %125 = vmatprep.subr.bf16.mxu0 0
    %126 = vmatpush1.bf16.msra.mxu0 0
    %127 = vmatprep.subr.bf16.mxu0 0
    %128 = vmatpush1.bf16.msra.mxu0 0
    %129 = vmatprep.subr.bf16.mxu0 0
    %130 = vmatpush1.bf16.msra.mxu0 0
    %131 = vmatprep.subr.bf16.mxu0 0
    %132 = vmatpush1.bf16.msra.mxu0 0
    %133 = vmatprep.subr.bf16.mxu0 0
    %134 = vmatpush1.bf16.msra.mxu0 0
    %135 = vmatprep.subr.bf16.mxu0 0
    %136 = vmatpush1.bf16.msra.mxu0 0
    %137 = vmatprep.subr.bf16.mxu0 0
    %138 = vmatpush1.bf16.msra.mxu0 0
    %139 = vmatprep.subr.bf16.mxu0 0
    %140 = vmatpush1.bf16.msra.mxu0 0
    %141 = vmatprep.subr.bf16.mxu0 0
    %142 = vmatpush1.bf16.msra.mxu0 0
    %143 = vmatprep.subr.bf16.mxu0 0
    %144 = vmatpush1.bf16.msra.mxu0 0
    %145 = vmatprep.subr.bf16.mxu0 0
    %146 = vmatpush1.bf16.msra.mxu0 0
    %147 = vmatprep.subr.bf16.mxu0 0
    %148 = vmatpush1.bf16.msra.mxu0 0
    %149 = vmatprep.mubr.bf16.mxu0 0
    %150 = vmatmul.mubr.bf16.gmra.mrb[0].mxu0 %v115
    %v151 = vpop.f32.mrb[0].mxu0
    %v152 = vadd.f32 0.0, %v151
    %v153 = vpop.f32.mrb[0].mxu0
    %v154 = vpop.f32.mrb[0].mxu0
    %v155 = vpop.f32.mrb[0].mxu0
    %156 = vdwg.mxu0
    %v157 = vadd.f32 %v63, %v152
    %v158 = vmul.f32 %v157, %v111
    %v159 = vtanh.pop %v158
    %v160 = vmul.f32 %v159, %v111
    %v161 = vadd.f32 %v160, %v112
    %v162 = vmul.f32 %v161, 0.0
    %164 = vrot.lane.b32.xlu0 %v161, 64
    %v165 = vpop.permute.xlu0 %164
    %v167 = vmul.f32 %v161, %v165
    %169 = vrot.lane.b32.xlu0 %v167, 32
    %v170 = vpop.permute.xlu0 %169
    %v172 = vadd.f32 %v162, %v170
    %v173 = vtanh.pop %v172
    %175 = vrot.lane.b32.xlu0 %v173, 64
    %v176 = vpop.permute.xlu0 %175
    %v178 = vmul.f32 %v161, %v176
    %v179 = vpack.c.bf16 %v178, %v178
    %181 = vrot.lane.b32.xlu0 %v179, 32
    %v182 = vpop.permute.xlu0 %181
    %v184 = vsel %vm113, %v182, 0
    %186 = vmatprep.subr.bf16.mxu0 0
    %187 = vmatpush1.bf16.msra.mxu0 %v42
    %188 = vmatprep.subr.bf16.mxu0 0
    %189 = vmatpush1.bf16.msra.mxu0 %v43
    %190 = vmatprep.subr.bf16.mxu0 0
    %191 = vmatpush1.bf16.msra.mxu0 0
    %192 = vmatprep.subr.bf16.mxu0 0
    %193 = vmatpush1.bf16.msra.mxu0 0
    %194 = vmatprep.subr.bf16.mxu0 0
    %195 = vmatpush1.bf16.msra.mxu0 0
    %196 = vmatprep.subr.bf16.mxu0 0
    %197 = vmatpush1.bf16.msra.mxu0 0
    %198 = vmatprep.subr.bf16.mxu0 0
    %199 = vmatpush1.bf16.msra.mxu0 0
    %200 = vmatprep.subr.bf16.mxu0 0
    %201 = vmatpush1.bf16.msra.mxu0 0
    %202 = vmatprep.subr.bf16.mxu0 0
    %203 = vmatpush1.bf16.msra.mxu0 0
    %204 = vmatprep.subr.bf16.mxu0 0
    %205 = vmatpush1.bf16.msra.mxu0 0
    %206 = vmatprep.subr.bf16.mxu0 0
    %207 = vmatpush1.bf16.msra.mxu0 0
    %208 = vmatprep.subr.bf16.mxu0 0
    %209 = vmatpush1.bf16.msra.mxu0 0
    %210 = vmatprep.subr.bf16.mxu0 0
    %211 = vmatpush1.bf16.msra.mxu0 0
    %212 = vmatprep.subr.bf16.mxu0 0
    %213 = vmatpush1.bf16.msra.mxu0 0
    %214 = vmatprep.subr.bf16.mxu0 0
    %215 = vmatpush1.bf16.msra.mxu0 0
    %216 = vmatprep.subr.bf16.mxu0 0
    %217 = vmatpush1.bf16.msra.mxu0 0
    %218 = vmatprep.mubr.bf16.mxu0 0
    %219 = vmatmul.mubr.bf16.gmra.mrb[0].mxu0 %v184
    %v220 = vpop.f32.mrb[0].mxu0
    %v221 = vadd.f32 0.0, %v220
    %v222 = vpop.f32.mrb[0].mxu0
    %v223 = vpop.f32.mrb[0].mxu0
    %v224 = vpop.f32.mrb[0].mxu0
    %225 = vdwg.mxu0
    %v226 = vadd.f32 %v69, %v221
    %v227 = vmul.f32 %v226, %v111
    %v228 = vtanh.pop %v227
    %v229 = vmul.f32 %v228, %v111
    %v230 = vadd.f32 %v229, %v112
    %v231 = vmul.f32 %v230, %v172
    %233 = vrot.lane.b32.xlu0 %v230, 64
    %v234 = vpop.permute.xlu0 %233
    %v236 = vmul.f32 %v230, %v234
    %238 = vrot.lane.b32.xlu0 %v236, 32
    %v239 = vpop.permute.xlu0 %238
    %v241 = vadd.f32 %v231, %v239
    %v242 = vtanh.pop %v241
    %244 = vrot.lane.b32.xlu0 %v242, 64
    %v245 = vpop.permute.xlu0 %244
    %v247 = vmul.f32 %v230, %v245
    %v248 = vpack.c.bf16 %v247, %v247
    %250 = vrot.lane.b32.xlu0 %v248, 32
    %v251 = vpop.permute.xlu0 %250
    %v253 = vsel %vm113, %v251, 0
    %255 = vmatprep.subr.bf16.mxu0 0
    %256 = vmatpush1.bf16.msra.mxu0 %v42
    %257 = vmatprep.subr.bf16.mxu0 0
    %258 = vmatpush1.bf16.msra.mxu0 %v43
    %259 = vmatprep.subr.bf16.mxu0 0
    %260 = vmatpush1.bf16.msra.mxu0 0
    %261 = vmatprep.subr.bf16.mxu0 0
    %262 = vmatpush1.bf16.msra.mxu0 0
    %263 = vmatprep.subr.bf16.mxu0 0
    %264 = vmatpush1.bf16.msra.mxu0 0
    %265 = vmatprep.subr.bf16.mxu0 0
    %266 = vmatpush1.bf16.msra.mxu0 0
    %267 = vmatprep.subr.bf16.mxu0 0
    %268 = vmatpush1.bf16.msra.mxu0 0
    %269 = vmatprep.subr.bf16.mxu0 0
    %270 = vmatpush1.bf16.msra.mxu0 0
    %271 = vmatprep.subr.bf16.mxu0 0
    %272 = vmatpush1.bf16.msra.mxu0 0
    %273 = vmatprep.subr.bf16.mxu0 0
    %274 = vmatpush1.bf16.msra.mxu0 0
    %275 = vmatprep.subr.bf16.mxu0 0
    %276 = vmatpush1.bf16.msra.mxu0 0
    %277 = vmatprep.subr.bf16.mxu0 0
    %278 = vmatpush1.bf16.msra.mxu0 0
    %279 = vmatprep.subr.bf16.mxu0 0
    %280 = vmatpush1.bf16.msra.mxu0 0
    %281 = vmatprep.subr.bf16.mxu0 0
    %282 = vmatpush1.bf16.msra.mxu0 0
    %283 = vmatprep.subr.bf16.mxu0 0
    %284 = vmatpush1.bf16.msra.mxu0 0
    %285 = vmatprep.subr.bf16.mxu0 0
    %286 = vmatpush1.bf16.msra.mxu0 0
    %287 = vmatprep.mubr.bf16.mxu0 0
    %288 = vmatmul.mubr.bf16.gmra.mrb[0].mxu0 %v253
    %v289 = vpop.f32.mrb[0].mxu0
    %v290 = vadd.f32 0.0, %v289
    %v291 = vpop.f32.mrb[0].mxu0
    %v292 = vpop.f32.mrb[0].mxu0
    %v293 = vpop.f32.mrb[0].mxu0
    %294 = vdwg.mxu0
    %v295 = vadd.f32 %v75, %v290
    %v296 = vmul.f32 %v295, %v111
    %v297 = vtanh.pop %v296
    %v298 = vmul.f32 %v297, %v111
    %v299 = vadd.f32 %v298, %v112
    %v300 = vmul.f32 %v299, %v241
    %302 = vrot.lane.b32.xlu0 %v299, 64
    %v303 = vpop.permute.xlu0 %302
    %v305 = vmul.f32 %v299, %v303
    %307 = vrot.lane.b32.xlu0 %v305, 32
    %v308 = vpop.permute.xlu0 %307
    %v310 = vadd.f32 %v300, %v308
    %v311 = vtanh.pop %v310
    %313 = vrot.lane.b32.xlu0 %v311, 64
    %v314 = vpop.permute.xlu0 %313
    %v316 = vmul.f32 %v299, %v314
    %v317 = vpack.c.bf16 %v316, %v316
    %319 = vrot.lane.b32.xlu0 %v317, 32
    %v320 = vpop.permute.xlu0 %319
    %v322 = vsel %vm113, %v320, 0
    %324 = vmatprep.subr.bf16.mxu0 0
    %325 = vmatpush1.bf16.msra.mxu0 %v42
    %326 = vmatprep.subr.bf16.mxu0 0
    %327 = vmatpush1.bf16.msra.mxu0 %v43
    %328 = vmatprep.subr.bf16.mxu0 0
    %329 = vmatpush1.bf16.msra.mxu0 0
    %330 = vmatprep.subr.bf16.mxu0 0
    %331 = vmatpush1.bf16.msra.mxu0 0
    %332 = vmatprep.subr.bf16.mxu0 0
    %333 = vmatpush1.bf16.msra.mxu0 0
    %334 = vmatprep.subr.bf16.mxu0 0
    %335 = vmatpush1.bf16.msra.mxu0 0
    %336 = vmatprep.subr.bf16.mxu0 0
    %337 = vmatpush1.bf16.msra.mxu0 0
    %338 = vmatprep.subr.bf16.mxu0 0
    %339 = vmatpush1.bf16.msra.mxu0 0
    %340 = vmatprep.subr.bf16.mxu0 0
    %341 = vmatpush1.bf16.msra.mxu0 0
    %342 = vmatprep.subr.bf16.mxu0 0
    %343 = vmatpush1.bf16.msra.mxu0 0
    %344 = vmatprep.subr.bf16.mxu0 0
    %345 = vmatpush1.bf16.msra.mxu0 0
    %346 = vmatprep.subr.bf16.mxu0 0
    %347 = vmatpush1.bf16.msra.mxu0 0
    %348 = vmatprep.subr.bf16.mxu0 0
    %349 = vmatpush1.bf16.msra.mxu0 0
    %350 = vmatprep.subr.bf16.mxu0 0
    %351 = vmatpush1.bf16.msra.mxu0 0
    %352 = vmatprep.subr.bf16.mxu0 0
    %353 = vmatpush1.bf16.msra.mxu0 0
    %354 = vmatprep.subr.bf16.mxu0 0
    %355 = vmatpush1.bf16.msra.mxu0 0
    %356 = vmatprep.mubr.bf16.mxu0 0
    %357 = vmatmul.mubr.bf16.gmra.mrb[0].mxu0 %v322
    %v358 = vpop.f32.mrb[0].mxu0
    %v359 = vadd.f32 0.0, %v358
    %v360 = vpop.f32.mrb[0].mxu0
    %v361 = vpop.f32.mrb[0].mxu0
    %v362 = vpop.f32.mrb[0].mxu0
    %363 = vdwg.mxu0
    %v364 = vadd.f32 %v81, %v359
    %v365 = vmul.f32 %v364, %v111
    %v366 = vtanh.pop %v365
    %v367 = vmul.f32 %v366, %v111
    %v368 = vadd.f32 %v367, %v112
    %v369 = vmul.f32 %v368, %v310
    %371 = vrot.lane.b32.xlu0 %v368, 64
    %v372 = vpop.permute.xlu0 %371
    %v374 = vmul.f32 %v368, %v372
    %376 = vrot.lane.b32.xlu0 %v374, 32
    %v377 = vpop.permute.xlu0 %376
    %v379 = vadd.f32 %v369, %v377
    %v380 = vtanh.pop %v379
    %382 = vrot.lane.b32.xlu0 %v380, 64
    %v383 = vpop.permute.xlu0 %382
    %v385 = vmul.f32 %v368, %v383
    %v386 = vpack.c.bf16 %v385, %v385
    %388 = vrot.lane.b32.xlu0 %v386, 32
    %v389 = vpop.permute.xlu0 %388
    %v391 = vsel %vm113, %v389, 0
    %393 = vmatprep.subr.bf16.mxu0 0
    %394 = vmatpush1.bf16.msra.mxu0 %v42
    %395 = vmatprep.subr.bf16.mxu0 0
    %396 = vmatpush1.bf16.msra.mxu0 %v43
    %397 = vmatprep.subr.bf16.mxu0 0
    %398 = vmatpush1.bf16.msra.mxu0 0
    %399 = vmatprep.subr.bf16.mxu0 0
    %400 = vmatpush1.bf16.msra.mxu0 0
    %401 = vmatprep.subr.bf16.mxu0 0
    %402 = vmatpush1.bf16.msra.mxu0 0
    %403 = vmatprep.subr.bf16.mxu0 0
    %404 = vmatpush1.bf16.msra.mxu0 0
    %405 = vmatprep.subr.bf16.mxu0 0
    %406 = vmatpush1.bf16.msra.mxu0 0
    %407 = vmatprep.subr.bf16.mxu0 0
    %408 = vmatpush1.bf16.msra.mxu0 0
    %409 = vmatprep.subr.bf16.mxu0 0
    %410 = vmatpush1.bf16.msra.mxu0 0
    %411 = vmatprep.subr.bf16.mxu0 0
    %412 = vmatpush1.bf16.msra.mxu0 0
    %413 = vmatprep.subr.bf16.mxu0 0
    %414 = vmatpush1.bf16.msra.mxu0 0
    %415 = vmatprep.subr.bf16.mxu0 0
    %416 = vmatpush1.bf16.msra.mxu0 0
    %417 = vmatprep.subr.bf16.mxu0 0
    %418 = vmatpush1.bf16.msra.mxu0 0
    %419 = vmatprep.subr.bf16.mxu0 0
    %420 = vmatpush1.bf16.msra.mxu0 0
    %421 = vmatprep.subr.bf16.mxu0 0
    %422 = vmatpush1.bf16.msra.mxu0 0
    %423 = vmatprep.subr.bf16.mxu0 0
    %424 = vmatpush1.bf16.msra.mxu0 0
    %425 = vmatprep.mubr.bf16.mxu0 0
    %426 = vmatmul.mubr.bf16.gmra.mrb[0].mxu0 %v391
    %v427 = vpop.f32.mrb[0].mxu0
    %v428 = vadd.f32 0.0, %v427
    %v429 = vpop.f32.mrb[0].mxu0
    %v430 = vpop.f32.mrb[0].mxu0
    %v431 = vpop.f32.mrb[0].mxu0
    %432 = vdwg.mxu0
    %v433 = vadd.f32 %v87, %v428
    %v434 = vmul.f32 %v433, %v111
    %v435 = vtanh.pop %v434
    %v436 = vmul.f32 %v435, %v111
    %v437 = vadd.f32 %v436, %v112
    %v438 = vmul.f32 %v437, %v379
    %440 = vrot.lane.b32.xlu0 %v437, 64
    %v441 = vpop.permute.xlu0 %440
    %v443 = vmul.f32 %v437, %v441
    %445 = vrot.lane.b32.xlu0 %v443, 32
    %v446 = vpop.permute.xlu0 %445
    %v448 = vadd.f32 %v438, %v446
    %v449 = vtanh.pop %v448
    %451 = vrot.lane.b32.xlu0 %v449, 64
    %v452 = vpop.permute.xlu0 %451
    %v454 = vmul.f32 %v437, %v452
    %v455 = vpack.c.bf16 %v454, %v454
    %457 = vrot.lane.b32.xlu0 %v455, 32
    %v458 = vpop.permute.xlu0 %457
    %v460 = vsel %vm113, %v458, 0
    %462 = vmatprep.subr.bf16.mxu0 0
    %463 = vmatpush1.bf16.msra.mxu0 %v42
    %464 = vmatprep.subr.bf16.mxu0 0
    %465 = vmatpush1.bf16.msra.mxu0 %v43
    %466 = vmatprep.subr.bf16.mxu0 0
    %467 = vmatpush1.bf16.msra.mxu0 0
    %468 = vmatprep.subr.bf16.mxu0 0
    %469 = vmatpush1.bf16.msra.mxu0 0
    %470 = vmatprep.subr.bf16.mxu0 0
    %471 = vmatpush1.bf16.msra.mxu0 0
    %472 = vmatprep.subr.bf16.mxu0 0
    %473 = vmatpush1.bf16.msra.mxu0 0
    %474 = vmatprep.subr.bf16.mxu0 0
    %475 = vmatpush1.bf16.msra.mxu0 0
    %476 = vmatprep.subr.bf16.mxu0 0
    %477 = vmatpush1.bf16.msra.mxu0 0
    %478 = vmatprep.subr.bf16.mxu0 0
    %479 = vmatpush1.bf16.msra.mxu0 0
    %480 = vmatprep.subr.bf16.mxu0 0
    %481 = vmatpush1.bf16.msra.mxu0 0
    %482 = vmatprep.subr.bf16.mxu0 0
    %483 = vmatpush1.bf16.msra.mxu0 0
    %484 = vmatprep.subr.bf16.mxu0 0
    %485 = vmatpush1.bf16.msra.mxu0 0
    %486 = vmatprep.subr.bf16.mxu0 0
    %487 = vmatpush1.bf16.msra.mxu0 0
    %488 = vmatprep.subr.bf16.mxu0 0
    %489 = vmatpush1.bf16.msra.mxu0 0
    %490 = vmatprep.subr.bf16.mxu0 0
    %491 = vmatpush1.bf16.msra.mxu0 0
    %492 = vmatprep.subr.bf16.mxu0 0
    %493 = vmatpush1.bf16.msra.mxu0 0
    %494 = vmatprep.mubr.bf16.mxu0 0
    %495 = vmatmul.mubr.bf16.gmra.mrb[0].mxu0 %v460
    %v496 = vpop.f32.mrb[0].mxu0
    %v497 = vadd.f32 0.0, %v496
    %v498 = vpop.f32.mrb[0].mxu0
    %v499 = vpop.f32.mrb[0].mxu0
    %v500 = vpop.f32.mrb[0].mxu0
    %501 = vdwg.mxu0
    %v502 = vadd.f32 %v93, %v497
    %v503 = vmul.f32 %v502, %v111
    %v504 = vtanh.pop %v503
    %v505 = vmul.f32 %v504, %v111
    %v506 = vadd.f32 %v505, %v112
    %v507 = vmul.f32 %v506, %v448
    %509 = vrot.lane.b32.xlu0 %v506, 64
    %v510 = vpop.permute.xlu0 %509
    %v512 = vmul.f32 %v506, %v510
    %514 = vrot.lane.b32.xlu0 %v512, 32
    %v515 = vpop.permute.xlu0 %514
    %v517 = vadd.f32 %v507, %v515
    %v518 = vtanh.pop %v517
    %520 = vrot.lane.b32.xlu0 %v518, 64
    %v521 = vpop.permute.xlu0 %520
    %v523 = vmul.f32 %v506, %v521
    %v524 = vpack.c.bf16 %v523, %v523
    %526 = vrot.lane.b32.xlu0 %v524, 32
    %v527 = vpop.permute.xlu0 %526
    %v529 = vsel %vm113, %v527, 0
    %531 = vmatprep.subr.bf16.mxu0 0
    %532 = vmatpush1.bf16.msra.mxu0 %v42
    %533 = vmatprep.subr.bf16.mxu0 0
    %534 = vmatpush1.bf16.msra.mxu0 %v43
    %535 = vmatprep.subr.bf16.mxu0 0
    %536 = vmatpush1.bf16.msra.mxu0 0
    %537 = vmatprep.subr.bf16.mxu0 0
    %538 = vmatpush1.bf16.msra.mxu0 0
    %539 = vmatprep.subr.bf16.mxu0 0
    %540 = vmatpush1.bf16.msra.mxu0 0
    %541 = vmatprep.subr.bf16.mxu0 0
    %542 = vmatpush1.bf16.msra.mxu0 0
    %543 = vmatprep.subr.bf16.mxu0 0
    %544 = vmatpush1.bf16.msra.mxu0 0
    %545 = vmatprep.subr.bf16.mxu0 0
    %546 = vmatpush1.bf16.msra.mxu0 0
    %547 = vmatprep.subr.bf16.mxu0 0
    %548 = vmatpush1.bf16.msra.mxu0 0
    %549 = vmatprep.subr.bf16.mxu0 0
    %550 = vmatpush1.bf16.msra.mxu0 0
    %551 = vmatprep.subr.bf16.mxu0 0
    %552 = vmatpush1.bf16.msra.mxu0 0
    %553 = vmatprep.subr.bf16.mxu0 0
    %554 = vmatpush1.bf16.msra.mxu0 0
    %555 = vmatprep.subr.bf16.mxu0 0
    %556 = vmatpush1.bf16.msra.mxu0 0
    %557 = vmatprep.subr.bf16.mxu0 0
    %558 = vmatpush1.bf16.msra.mxu0 0
    %559 = vmatprep.subr.bf16.mxu0 0
    %560 = vmatpush1.bf16.msra.mxu0 0
    %561 = vmatprep.subr.bf16.mxu0 0
    %562 = vmatpush1.bf16.msra.mxu0 0
    %563 = vmatprep.mubr.bf16.mxu0 0
    %564 = vmatmul.mubr.bf16.gmra.mrb[0].mxu0 %v529
    %v565 = vpop.f32.mrb[0].mxu0
    %v566 = vadd.f32 0.0, %v565
    %v567 = vpop.f32.mrb[0].mxu0
    %v568 = vpop.f32.mrb[0].mxu0
    %v569 = vpop.f32.mrb[0].mxu0
    %570 = vdwg.mxu0
    %v571 = vadd.f32 %v99, %v566
    %v572 = vmul.f32 %v571, %v111
    %v573 = vtanh.pop %v572
    %v574 = vmul.f32 %v573, %v111
    %v575 = vadd.f32 %v574, %v112
    %v576 = vmul.f32 %v575, %v517
    %578 = vrot.lane.b32.xlu0 %v575, 64
    %v579 = vpop.permute.xlu0 %578
    %v581 = vmul.f32 %v575, %v579
    %583 = vrot.lane.b32.xlu0 %v581, 32
    %v584 = vpop.permute.xlu0 %583
    %v586 = vadd.f32 %v576, %v584
    %v587 = vtanh.pop %v586
    %589 = vrot.lane.b32.xlu0 %v587, 64
    %v590 = vpop.permute.xlu0 %589
    %v592 = vmul.f32 %v575, %v590
    %v593 = vpack.c.bf16 %v592, %v592
    %595 = vrot.lane.b32.xlu0 %v593, 32
    %v596 = vpop.permute.xlu0 %595
    %v598 = vsel %vm113, %v596, 0
    %600 = vmatprep.subr.bf16.mxu0 0
    %601 = vmatpush1.bf16.msra.mxu0 %v42
    %602 = vmatprep.subr.bf16.mxu0 0
    %603 = vmatpush1.bf16.msra.mxu0 %v43
    %604 = vmatprep.subr.bf16.mxu0 0
    %605 = vmatpush1.bf16.msra.mxu0 0
    %606 = vmatprep.subr.bf16.mxu0 0
    %607 = vmatpush1.bf16.msra.mxu0 0
    %608 = vmatprep.subr.bf16.mxu0 0
    %609 = vmatpush1.bf16.msra.mxu0 0
    %610 = vmatprep.subr.bf16.mxu0 0
    %611 = vmatpush1.bf16.msra.mxu0 0
    %612 = vmatprep.subr.bf16.mxu0 0
    %613 = vmatpush1.bf16.msra.mxu0 0
    %614 = vmatprep.subr.bf16.mxu0 0
    %615 = vmatpush1.bf16.msra.mxu0 0
    %616 = vmatprep.subr.bf16.mxu0 0
    %617 = vmatpush1.bf16.msra.mxu0 0
    %618 = vmatprep.subr.bf16.mxu0 0
    %619 = vmatpush1.bf16.msra.mxu0 0
    %620 = vmatprep.subr.bf16.mxu0 0
    %621 = vmatpush1.bf16.msra.mxu0 0
    %622 = vmatprep.subr.bf16.mxu0 0
    %623 = vmatpush1.bf16.msra.mxu0 0
    %624 = vmatprep.subr.bf16.mxu0 0
    %625 = vmatpush1.bf16.msra.mxu0 0
    %626 = vmatprep.subr.bf16.mxu0 0
    %627 = vmatpush1.bf16.msra.mxu0 0
    %628 = vmatprep.subr.bf16.mxu0 0
    %629 = vmatpush1.bf16.msra.mxu0 0
    %630 = vmatprep.subr.bf16.mxu0 0
    %631 = vmatpush1.bf16.msra.mxu0 0
    %632 = vmatprep.mubr.bf16.mxu0 0
    %633 = vmatmul.mubr.bf16.gmra.mrb[0].mxu0 %v598
    %v634 = vpop.f32.mrb[0].mxu0
    %v635 = vadd.f32 0.0, %v634
    %v636 = vpop.f32.mrb[0].mxu0
    %v637 = vpop.f32.mrb[0].mxu0
    %v638 = vpop.f32.mrb[0].mxu0
    %639 = vdwg.mxu0
    %v640 = vadd.f32 %v105, %v635
    %v641 = vmul.f32 %v640, %v111
    %v642 = vtanh.pop %v641
    %v643 = vmul.f32 %v642, %v111
    %v644 = vadd.f32 %v643, %v112
    %v645 = vmul.f32 %v644, %v586
    %647 = vrot.lane.b32.xlu0 %v644, 64
    %v648 = vpop.permute.xlu0 %647
    %v650 = vmul.f32 %v644, %v648
    %652 = vrot.lane.b32.xlu0 %v650, 32
    %v653 = vpop.permute.xlu0 %652
    %v655 = vadd.f32 %v645, %v653
    %v656 = vtanh.pop %v655
    %658 = vrot.lane.b32.xlu0 %v656, 64
    %v659 = vpop.permute.xlu0 %658
    %v661 = vmul.f32 %v644, %v659
    %v662 = vlaneseq
    %v663 = vshrl.u32 %v662, 7
    %v664 = vsub.s32 0, %v663
    %v665 = vrot.slane %v46, %v664
    %667 = vrot.lane.b32.xlu0 %v665, 96
    %v668 = vpop.permute.xlu0 %667
    %v670 = vmul.f32 %v661, %v668
    %672 = vrot.lane.b32.xlu0 %v670, 32
    %v673 = vpop.permute.xlu0 %672
    %v675 = vsel %vm113, %v673, 0.0
    %676 = vadd.xlane.f32.xlu0 %v675
    %v677 = vpop.xlane.xlu0 %676
    %v678 = vlaneseq
    %v679 = vshrl.u32 %v678, 7
    %v680 = vsub.s32 0, %v679
    %v681 = vrot.slane %v47, %v680
    %v682 = vadd.f32 %v677, %v681
    %vm683 = vcmask 7168
    %684 = vst.msk [vmem:[%s2] sm:$0xff] %vm683, %v682
    // Predicated region
    $region18: #{tpu_custom_call.1} parent=1 // pred_check
      _
    $region19: #{tpu_custom_call.1} parent=1 // pred_check_branch
      %686 = sbr.rel (0) target = $region21
    $region20: #{tpu_custom_call.1} parent=1 // pred_region
      _
    $region21: #{tpu_custom_call.1} parent=1 // pred_fallthru
      _
    // Predicated region
    $region22: #{tpu_custom_call.1} parent=1 // pred_check
      _
    $region23: #{tpu_custom_call.1} parent=1 // pred_check_branch
      %688 = sbr.rel (0) target = $region25
    $region24: #{tpu_custom_call.1} parent=1 // pred_region
      _
    $region25: #{tpu_custom_call.1} parent=1 // pred_fallthru
      _
    %689 = vsyncpa [#allocation3], 1
    %690 = vsyncpa [#allocation5], 1

</llo_original>
